<compile_context>
chip_gen: v7x
topology: tpu7x:2x2x1
jax: 0.10.0
libtpu: 0.0.40
codegen_flags: <defaults>
</compile_context>

<pallas_src>
import functools

import jax
import jax.numpy as jnp
from jax.experimental import pallas as pl
from jax.experimental.pallas import tpu as pltpu


# ---------------------------------------------------------------------------
# Lanczos lgamma (g=7, n=9) for strictly positive arguments, with the series
#   a(w) = c0 + sum_i c_i/(w+i)
# folded into  a(w) = c0 + N1(w)/D1(w) + N2(w)/D2(w)  (two rational groups).
# Polynomial coefficients are expanded once at import time in pure Python.
# ---------------------------------------------------------------------------
_LANCZOS_G = 7.0
_HALF_LOG_2PI = 0.9189385332046727  # 0.5 * log(2*pi)
_LANCZOS_COEF = (
    0.99999999999980993,
    676.5203681218851,
    -1259.1392167224028,
    771.32342877765313,
    -176.61502916214059,
    12.507343278686905,
    -0.13857109526572012,
    9.9843695780195716e-6,
    1.5056327351493116e-7,
)


def _build_lanczos_rational():
    c = list(_LANCZOS_COEF)

    def pmul(p, q):
        r = [0.0] * (len(p) + len(q) - 1)
        for i, a in enumerate(p):
            for j, b in enumerate(q):
                r[i + j] += a * b
        return r

    def padd(p, q):
        n = max(len(p), len(q))
        return [
            (p[i] if i < len(p) else 0.0) + (q[i] if i < len(q) else 0.0)
            for i in range(n)
        ]

    def group(idx):
        # sum_i c_i/(w+i)  for i in idx  ->  N(w)/D(w)
        den = [1.0]
        for i in idx:
            den = pmul(den, [float(i), 1.0])  # (w + i), low->high coeffs
        num = [0.0]
        for i in idx:
            others = [1.0]
            for j in idx:
                if j != i:
                    others = pmul(others, [float(j), 1.0])
            num = padd(num, [c[i] * v for v in others])
        return tuple(reversed(num)), tuple(reversed(den))  # high->low for Horner

    n1, d1 = group([1, 2, 3, 4])
    n2, d2 = group([5, 6, 7, 8])
    return c[0], n1, d1, n2, d2


_LC0, _NUM1, _DEN1, _NUM2, _DEN2 = _build_lanczos_rational()


def _horner(w, coeffs):
    acc = jnp.full_like(w, coeffs[0])
    for c in coeffs[1:]:
        acc = acc * w + c
    return acc


def _lgamma_pos(z):
    """lgamma(z) for z > 0 (no reflection). 2 divides + 2 logs per call."""
    w = z - 1.0
    a = (
        _LC0
        + _horner(w, _NUM1) / _horner(w, _DEN1)
        + _horner(w, _NUM2) / _horner(w, _DEN2)
    )
    t = w + _LANCZOS_G + 0.5
    return _HALF_LOG_2PI + (w + 0.5) * jnp.log(t) - t + jnp.log(a)


# ---------------------------------------------------------------------------
# Kernel: per-tile elementwise NB log-likelihood, reduced to a lane-dense
# (8, G) partial-sum block per grid step. No cross-step dependency.
# ---------------------------------------------------------------------------
def _nb_loss_kernel(mu_ref, y_ref, theta_ref, const_ref, out_ref, *,
                    eps, n_rows, tile_rows):
    mu = mu_ref[...]          # (tm, G)
    y = y_ref[...]            # (tm, G)
    theta = theta_ref[...]    # (1, G) -> broadcasts
    const = const_ref[...]    # (1, G): theta*log(theta+eps) - lgamma(theta)

    log_theta_mu_eps = jnp.log(theta + mu + eps)
    res = (
        const
        - theta * log_theta_mu_eps
        + y * (jnp.log(mu + eps) - log_theta_mu_eps)
        + _lgamma_pos(y + theta)
        - _lgamma_pos(y + 1.0)
    )
    # torch.where(torch.isnan(res), +inf, res)
    res = jnp.where(jnp.isnan(res), jnp.inf, res)

    # Mask padded rows of the last (partial) tile so they contribute zero.
    if n_rows % tile_rows != 0:
        remaining = n_rows - pl.program_id(0) * tile_rows
        row_ids = jax.lax.broadcasted_iota(jnp.int32, res.shape, 0)
        res = jnp.where(row_ids < remaining, res, 0.0)

    tm, g = res.shape
    # Fold tm rows down to an (8, G) partial-sum slab (cheap VPU adds).
    out_ref[...] = jnp.sum(res.reshape(tm // 8, 8, g), axis=0)


def _choose_tile_rows(n_rows, n_cols, target_bytes=2 << 20):
    """Largest row tile with ~2 MiB per input buffer, multiple of 8, capped."""
    rows = max(8, min(1024, target_bytes // (n_cols * 4)))
    rows = (rows // 8) * 8
    # Don't exceed the (row-rounded) batch; keep blocks no larger than needed.
    rows = min(rows, max(8, (n_rows // 8) * 8 if n_rows >= 8 else 8))
    return max(8, rows)


def nb_loss(mu, y, theta, eps=1e-8, *, tile_rows=None):
    """Pallas TPU implementation of NBLoss.forward. Returns scalar float32."""
    mu = jnp.asarray(mu, jnp.float32)
    y = jnp.asarray(y, jnp.float32)
    theta = jnp.asarray(theta, jnp.float32)
    if theta.ndim == 1:
        theta = theta.reshape(1, theta.shape[0])  # matches theta.view(1, G)

    N, G = mu.shape
    if tile_rows is None:
        tile_rows = _choose_tile_rows(N, G)
    tile_rows = max(8, (tile_rows // 8) * 8)
    num_tiles = (N + tile_rows - 1) // tile_rows

    # Hoisted theta-only terms: computed once, reused by every grid step.
    const_row = theta * jnp.log(theta + eps) - jax.scipy.special.gammaln(theta)
    const_row = const_row.astype(jnp.float32)

    kernel = functools.partial(
        _nb_loss_kernel, eps=float(eps), n_rows=N, tile_rows=tile_rows
    )

    partials = pl.pallas_call(
        kernel,
        out_shape=jax.ShapeDtypeStruct((num_tiles * 8, G), jnp.float32),
        grid_spec=pltpu.PrefetchScalarGridSpec(
            num_scalar_prefetch=0,
            grid=(num_tiles,),
            in_specs=[
                pl.BlockSpec((tile_rows, G), lambda i: (i, 0)),  # mu
                pl.BlockSpec((tile_rows, G), lambda i: (i, 0)),  # y
                pl.BlockSpec((1, G), lambda i: (0, 0)),          # theta (bcast)
                pl.BlockSpec((1, G), lambda i: (0, 0)),          # hoisted const
            ],
            out_specs=pl.BlockSpec((8, G), lambda i: (i, 0)),    # partial sums
        ),
        compiler_params=pltpu.CompilerParams(
            dimension_semantics=("parallel",),          # megacore-shardable
            vmem_limit_bytes=48 * 1024 * 1024,          # safe on v5e/v6e/v7x
        ),
    )(mu, y, theta, const_row)

    total = float(N * G)
    return -(jnp.sum(partials) / total)


# Pure-JAX reference (for validation only).
def nb_loss_ref(mu, y, theta, eps=1e-8):
    mu = jnp.asarray(mu, jnp.float32)
    y = jnp.asarray(y, jnp.float32)
    theta = jnp.asarray(theta, jnp.float32)
    if theta.ndim == 1:
        theta = theta.reshape(1, -1)
    lgamma = jax.scipy.special.gammaln
    log_theta_mu_eps = jnp.log(theta + mu + eps)
    res = (
        theta * (jnp.log(theta + eps) - log_theta_mu_eps)
        + y * (jnp.log(mu + eps) - log_theta_mu_eps)
        + lgamma(y + theta)
        - lgamma(theta)
        - lgamma(y + 1.0)
    )
    res = jnp.where(jnp.isnan(res), jnp.inf, res)
    return -jnp.mean(res)


if __name__ == "__main__":
    key = jax.random.PRNGKey(0)
    k_mu, k_y, k_th, k2_mu, k2_y = jax.random.split(key, 5)

    # Case 1: small, divisible batch.
    N, G = 16, 128
    mu = jax.random.uniform(k_mu, (N, G), jnp.float32, minval=0.1, maxval=5.0)
    y = jnp.floor(
        jax.random.uniform(k_y, (N, G), jnp.float32, minval=0.0, maxval=10.0)
    )
    theta = jax.random.uniform(k_th, (G,), jnp.float32, minval=0.5, maxval=4.0)

    loss = nb_loss(mu, y, theta)
    jax.block_until_ready(loss)
    ref = nb_loss_ref(mu, y, theta)
    assert jnp.allclose(loss, ref, rtol=1e-3, atol=1e-3), (loss, ref)

    # Case 2: batch not divisible by the tile -> exercises the row mask.
    N2 = 13
    mu2 = jax.random.uniform(k2_mu, (N2, G), jnp.float32, minval=0.1, maxval=5.0)
    y2 = jnp.floor(
        jax.random.uniform(k2_y, (N2, G), jnp.float32, minval=0.0, maxval=20.0)
    )
    loss2 = nb_loss(mu2, y2, theta)
    jax.block_until_ready(loss2)
    ref2 = nb_loss_ref(mu2, y2, theta)
    assert jnp.allclose(loss2, ref2, rtol=1e-3, atol=1e-3), (loss2, ref2)

    print("KERNEL_OK")
</pallas_src>

<mosaic_0001>
module attributes {stable_mosaic.version = 11 : i64} {
  func.func @_nb_loss_kernel(%arg0: i32, %arg1: memref<16x128xf32, #tpu.memory_space<vmem>>, %arg2: memref<16x128xf32, #tpu.memory_space<vmem>>, %arg3: memref<1x128xf32, #tpu.memory_space<vmem>>, %arg4: memref<1x128xf32, #tpu.memory_space<vmem>>, %arg5: memref<8x128xf32, #tpu.memory_space<vmem>>) attributes {dimension_semantics = [#tpu.dimension_semantics<parallel>], iteration_bounds = array<i64: 1>, scalar_prefetch = 0 : i64, scratch_operands = 0 : i64, tpu.core_type = #tpu.core_type<tc>, window_params = [{transform_indices = @transform_0, window_bounds = array<i64: 16, 128>}, {transform_indices = @transform_1, window_bounds = array<i64: 16, 128>}, {pipeline_mode = #tpu.pipeline_mode<synchronous>, transform_indices = @transform_2, window_bounds = array<i64: 1, 128>}, {pipeline_mode = #tpu.pipeline_mode<synchronous>, transform_indices = @transform_3, window_bounds = array<i64: 1, 128>}, {transform_indices = @transform_4, window_bounds = array<i64: 8, 128>}]} {
    %c0 = arith.constant 0 : index
    %c0_0 = arith.constant 0 : index
    %0 = vector.load %arg1[%c0, %c0_0] : memref<16x128xf32, #tpu.memory_space<vmem>>, vector<16x128xf32>
    %c0_1 = arith.constant 0 : index
    %c0_2 = arith.constant 0 : index
    %1 = vector.load %arg2[%c0_1, %c0_2] : memref<16x128xf32, #tpu.memory_space<vmem>>, vector<16x128xf32>
    %c0_3 = arith.constant 0 : index
    %c0_4 = arith.constant 0 : index
    %2 = vector.load %arg3[%c0_3, %c0_4] : memref<1x128xf32, #tpu.memory_space<vmem>>, vector<1x128xf32>
    %c0_5 = arith.constant 0 : index
    %c0_6 = arith.constant 0 : index
    %3 = vector.load %arg4[%c0_5, %c0_6] : memref<1x128xf32, #tpu.memory_space<vmem>>, vector<1x128xf32>
    %4 = vector.broadcast %2 : vector<1x128xf32> to vector<16x128xf32>
    %5 = arith.addf %4, %0 : vector<16x128xf32>
    %cst = arith.constant 9.99999993E-9 : f32
    %6 = vector.broadcast %cst : f32 to vector<16x128xf32>
    %7 = arith.addf %5, %6 : vector<16x128xf32>
    %8 = math.log %7 : vector<16x128xf32>
    %9 = vector.broadcast %2 : vector<1x128xf32> to vector<16x128xf32>
    %10 = arith.mulf %9, %8 : vector<16x128xf32>
    %11 = vector.broadcast %3 : vector<1x128xf32> to vector<16x128xf32>
    %12 = arith.subf %11, %10 : vector<16x128xf32>
    %cst_7 = arith.constant 9.99999993E-9 : f32
    %13 = vector.broadcast %cst_7 : f32 to vector<16x128xf32>
    %14 = arith.addf %0, %13 : vector<16x128xf32>
    %15 = math.log %14 : vector<16x128xf32>
    %16 = arith.subf %15, %8 : vector<16x128xf32>
    %17 = arith.mulf %1, %16 : vector<16x128xf32>
    %18 = arith.addf %12, %17 : vector<16x128xf32>
    %19 = vector.broadcast %2 : vector<1x128xf32> to vector<16x128xf32>
    %20 = arith.addf %1, %19 : vector<16x128xf32>
    %cst_8 = arith.constant 1.000000e+00 : f32
    %21 = vector.broadcast %cst_8 : f32 to vector<16x128xf32>
    %22 = arith.subf %20, %21 : vector<16x128xf32>
    %cst_9 = arith.constant 12.089551 : f32
    %23 = vector.broadcast %cst_9 : f32 to vector<16x128xf32>
    %24 = arith.mulf %23, %22 : vector<16x128xf32>
    %cst_10 = arith.constant 355.143402 : f32
    %25 = vector.broadcast %cst_10 : f32 to vector<16x128xf32>
    %26 = arith.addf %24, %25 : vector<16x128xf32>
    %27 = arith.mulf %26, %22 : vector<16x128xf32>
    %cst_11 = arith.constant 2521.64722 : f32
    %28 = vector.broadcast %cst_11 : f32 to vector<16x128xf32>
    %29 = arith.addf %27, %28 : vector<16x128xf32>
    %30 = arith.mulf %29, %22 : vector<16x128xf32>
    %cst_12 = arith.constant 6237.71533 : f32
    %31 = vector.broadcast %cst_12 : f32 to vector<16x128xf32>
    %32 = arith.addf %30, %31 : vector<16x128xf32>
    %cst_13 = arith.constant 1.000000e+00 : f32
    %33 = vector.broadcast %cst_13 : f32 to vector<16x128xf32>
    %34 = arith.mulf %33, %22 : vector<16x128xf32>
    %cst_14 = arith.constant 1.000000e+01 : f32
    %35 = vector.broadcast %cst_14 : f32 to vector<16x128xf32>
    %36 = arith.addf %34, %35 : vector<16x128xf32>
    %37 = arith.mulf %36, %22 : vector<16x128xf32>
    %cst_15 = arith.constant 3.500000e+01 : f32
    %38 = vector.broadcast %cst_15 : f32 to vector<16x128xf32>
    %39 = arith.addf %37, %38 : vector<16x128xf32>
    %40 = arith.mulf %39, %22 : vector<16x128xf32>
    %cst_16 = arith.constant 5.000000e+01 : f32
    %41 = vector.broadcast %cst_16 : f32 to vector<16x128xf32>
    %42 = arith.addf %40, %41 : vector<16x128xf32>
    %43 = arith.mulf %42, %22 : vector<16x128xf32>
    %cst_17 = arith.constant 2.400000e+01 : f32
    %44 = vector.broadcast %cst_17 : f32 to vector<16x128xf32>
    %45 = arith.addf %43, %44 : vector<16x128xf32>
    %46 = arith.divf %32, %45 : vector<16x128xf32>
    %cst_18 = arith.constant 1.000000e+00 : f32
    %47 = vector.broadcast %cst_18 : f32 to vector<16x128xf32>
    %48 = arith.addf %47, %46 : vector<16x128xf32>
    %cst_19 = arith.constant 12.368782 : f32
    %49 = vector.broadcast %cst_19 : f32 to vector<16x128xf32>
    %50 = arith.mulf %49, %22 : vector<16x128xf32>
    %cst_20 = arith.constant 259.882965 : f32
    %51 = vector.broadcast %cst_20 : f32 to vector<16x128xf32>
    %52 = arith.addf %50, %51 : vector<16x128xf32>
    %53 = arith.mulf %52, %22 : vector<16x128xf32>
    %cst_21 = arith.constant 1807.92053 : f32
    %54 = vector.broadcast %cst_21 : f32 to vector<16x128xf32>
    %55 = arith.addf %53, %54 : vector<16x128xf32>
    %56 = arith.mulf %55, %22 : vector<16x128xf32>
    %cst_22 = arith.constant 4.163670e+03 : f32
    %57 = vector.broadcast %cst_22 : f32 to vector<16x128xf32>
    %58 = arith.addf %56, %57 : vector<16x128xf32>
    %cst_23 = arith.constant 1.000000e+00 : f32
    %59 = vector.broadcast %cst_23 : f32 to vector<16x128xf32>
    %60 = arith.mulf %59, %22 : vector<16x128xf32>
    %cst_24 = arith.constant 2.600000e+01 : f32
    %61 = vector.broadcast %cst_24 : f32 to vector<16x128xf32>
    %62 = arith.addf %60, %61 : vector<16x128xf32>
    %63 = arith.mulf %62, %22 : vector<16x128xf32>
    %cst_25 = arith.constant 2.510000e+02 : f32
    %64 = vector.broadcast %cst_25 : f32 to vector<16x128xf32>
    %65 = arith.addf %63, %64 : vector<16x128xf32>
    %66 = arith.mulf %65, %22 : vector<16x128xf32>
    %cst_26 = arith.constant 1.066000e+03 : f32
    %67 = vector.broadcast %cst_26 : f32 to vector<16x128xf32>
    %68 = arith.addf %66, %67 : vector<16x128xf32>
    %69 = arith.mulf %68, %22 : vector<16x128xf32>
    %cst_27 = arith.constant 1.680000e+03 : f32
    %70 = vector.broadcast %cst_27 : f32 to vector<16x128xf32>
    %71 = arith.addf %69, %70 : vector<16x128xf32>
    %72 = arith.divf %58, %71 : vector<16x128xf32>
    %73 = arith.addf %48, %72 : vector<16x128xf32>
    %cst_28 = arith.constant 7.000000e+00 : f32
    %74 = vector.broadcast %cst_28 : f32 to vector<16x128xf32>
    %75 = arith.addf %22, %74 : vector<16x128xf32>
    %cst_29 = arith.constant 5.000000e-01 : f32
    %76 = vector.broadcast %cst_29 : f32 to vector<16x128xf32>
    %77 = arith.addf %75, %76 : vector<16x128xf32>
    %cst_30 = arith.constant 5.000000e-01 : f32
    %78 = vector.broadcast %cst_30 : f32 to vector<16x128xf32>
    %79 = arith.addf %22, %78 : vector<16x128xf32>
    %80 = math.log %77 : vector<16x128xf32>
    %81 = arith.mulf %79, %80 : vector<16x128xf32>
    %cst_31 = arith.constant 0.918938517 : f32
    %82 = vector.broadcast %cst_31 : f32 to vector<16x128xf32>
    %83 = arith.addf %82, %81 : vector<16x128xf32>
    %84 = arith.subf %83, %77 : vector<16x128xf32>
    %85 = math.log %73 : vector<16x128xf32>
    %86 = arith.addf %84, %85 : vector<16x128xf32>
    %87 = arith.addf %18, %86 : vector<16x128xf32>
    %cst_32 = arith.constant 1.000000e+00 : f32
    %88 = vector.broadcast %cst_32 : f32 to vector<16x128xf32>
    %89 = arith.addf %1, %88 : vector<16x128xf32>
    %cst_33 = arith.constant 1.000000e+00 : f32
    %90 = vector.broadcast %cst_33 : f32 to vector<16x128xf32>
    %91 = arith.subf %89, %90 : vector<16x128xf32>
    %cst_34 = arith.constant 12.089551 : f32
    %92 = vector.broadcast %cst_34 : f32 to vector<16x128xf32>
    %93 = arith.mulf %92, %91 : vector<16x128xf32>
    %cst_35 = arith.constant 355.143402 : f32
    %94 = vector.broadcast %cst_35 : f32 to vector<16x128xf32>
    %95 = arith.addf %93, %94 : vector<16x128xf32>
    %96 = arith.mulf %95, %91 : vector<16x128xf32>
    %cst_36 = arith.constant 2521.64722 : f32
    %97 = vector.broadcast %cst_36 : f32 to vector<16x128xf32>
    %98 = arith.addf %96, %97 : vector<16x128xf32>
    %99 = arith.mulf %98, %91 : vector<16x128xf32>
    %cst_37 = arith.constant 6237.71533 : f32
    %100 = vector.broadcast %cst_37 : f32 to vector<16x128xf32>
    %101 = arith.addf %99, %100 : vector<16x128xf32>
    %cst_38 = arith.constant 1.000000e+00 : f32
    %102 = vector.broadcast %cst_38 : f32 to vector<16x128xf32>
    %103 = arith.mulf %102, %91 : vector<16x128xf32>
    %cst_39 = arith.constant 1.000000e+01 : f32
    %104 = vector.broadcast %cst_39 : f32 to vector<16x128xf32>
    %105 = arith.addf %103, %104 : vector<16x128xf32>
    %106 = arith.mulf %105, %91 : vector<16x128xf32>
    %cst_40 = arith.constant 3.500000e+01 : f32
    %107 = vector.broadcast %cst_40 : f32 to vector<16x128xf32>
    %108 = arith.addf %106, %107 : vector<16x128xf32>
    %109 = arith.mulf %108, %91 : vector<16x128xf32>
    %cst_41 = arith.constant 5.000000e+01 : f32
    %110 = vector.broadcast %cst_41 : f32 to vector<16x128xf32>
    %111 = arith.addf %109, %110 : vector<16x128xf32>
    %112 = arith.mulf %111, %91 : vector<16x128xf32>
    %cst_42 = arith.constant 2.400000e+01 : f32
    %113 = vector.broadcast %cst_42 : f32 to vector<16x128xf32>
    %114 = arith.addf %112, %113 : vector<16x128xf32>
    %115 = arith.divf %101, %114 : vector<16x128xf32>
    %cst_43 = arith.constant 1.000000e+00 : f32
    %116 = vector.broadcast %cst_43 : f32 to vector<16x128xf32>
    %117 = arith.addf %116, %115 : vector<16x128xf32>
    %cst_44 = arith.constant 12.368782 : f32
    %118 = vector.broadcast %cst_44 : f32 to vector<16x128xf32>
    %119 = arith.mulf %118, %91 : vector<16x128xf32>
    %cst_45 = arith.constant 259.882965 : f32
    %120 = vector.broadcast %cst_45 : f32 to vector<16x128xf32>
    %121 = arith.addf %119, %120 : vector<16x128xf32>
    %122 = arith.mulf %121, %91 : vector<16x128xf32>
    %cst_46 = arith.constant 1807.92053 : f32
    %123 = vector.broadcast %cst_46 : f32 to vector<16x128xf32>
    %124 = arith.addf %122, %123 : vector<16x128xf32>
    %125 = arith.mulf %124, %91 : vector<16x128xf32>
    %cst_47 = arith.constant 4.163670e+03 : f32
    %126 = vector.broadcast %cst_47 : f32 to vector<16x128xf32>
    %127 = arith.addf %125, %126 : vector<16x128xf32>
    %cst_48 = arith.constant 1.000000e+00 : f32
    %128 = vector.broadcast %cst_48 : f32 to vector<16x128xf32>
    %129 = arith.mulf %128, %91 : vector<16x128xf32>
    %cst_49 = arith.constant 2.600000e+01 : f32
    %130 = vector.broadcast %cst_49 : f32 to vector<16x128xf32>
    %131 = arith.addf %129, %130 : vector<16x128xf32>
    %132 = arith.mulf %131, %91 : vector<16x128xf32>
    %cst_50 = arith.constant 2.510000e+02 : f32
    %133 = vector.broadcast %cst_50 : f32 to vector<16x128xf32>
    %134 = arith.addf %132, %133 : vector<16x128xf32>
    %135 = arith.mulf %134, %91 : vector<16x128xf32>
    %cst_51 = arith.constant 1.066000e+03 : f32
    %136 = vector.broadcast %cst_51 : f32 to vector<16x128xf32>
    %137 = arith.addf %135, %136 : vector<16x128xf32>
    %138 = arith.mulf %137, %91 : vector<16x128xf32>
    %cst_52 = arith.constant 1.680000e+03 : f32
    %139 = vector.broadcast %cst_52 : f32 to vector<16x128xf32>
    %140 = arith.addf %138, %139 : vector<16x128xf32>
    %141 = arith.divf %127, %140 : vector<16x128xf32>
    %142 = arith.addf %117, %141 : vector<16x128xf32>
    %cst_53 = arith.constant 7.000000e+00 : f32
    %143 = vector.broadcast %cst_53 : f32 to vector<16x128xf32>
    %144 = arith.addf %91, %143 : vector<16x128xf32>
    %cst_54 = arith.constant 5.000000e-01 : f32
    %145 = vector.broadcast %cst_54 : f32 to vector<16x128xf32>
    %146 = arith.addf %144, %145 : vector<16x128xf32>
    %cst_55 = arith.constant 5.000000e-01 : f32
    %147 = vector.broadcast %cst_55 : f32 to vector<16x128xf32>
    %148 = arith.addf %91, %147 : vector<16x128xf32>
    %149 = math.log %146 : vector<16x128xf32>
    %150 = arith.mulf %148, %149 : vector<16x128xf32>
    %cst_56 = arith.constant 0.918938517 : f32
    %151 = vector.broadcast %cst_56 : f32 to vector<16x128xf32>
    %152 = arith.addf %151, %150 : vector<16x128xf32>
    %153 = arith.subf %152, %146 : vector<16x128xf32>
    %154 = math.log %142 : vector<16x128xf32>
    %155 = arith.addf %153, %154 : vector<16x128xf32>
    %156 = arith.subf %87, %155 : vector<16x128xf32>
    %157 = arith.cmpf one, %156, %156 : vector<16x128xf32>
    %cst_57 = arith.constant 0x7F800000 : f32
    %158 = vector.broadcast %cst_57 : f32 to vector<16x128xf32>
    %159 = arith.select %157, %158, %156 : vector<16x128xi1>, vector<16x128xf32>
    %160 = vector.shape_cast %159 : vector<16x128xf32> to vector<2x8x128xf32>
    %cst_58 = arith.constant dense<0.000000e+00> : vector<8x128xf32>
    %161 = vector.multi_reduction <add>, %160, %cst_58 [0] : vector<2x8x128xf32> to vector<8x128xf32>
    %c0_59 = arith.constant 0 : index
    %c0_60 = arith.constant 0 : index
    %162 = vector.load %arg5[%c0_59, %c0_60] : memref<8x128xf32, #tpu.memory_space<vmem>>, vector<8x128xf32>
    tpu.vector_store %arg5[%c0_59, %c0_60], %161 {strides = array<i32>} : memref<8x128xf32, #tpu.memory_space<vmem>>, vector<8x128xf32>,
    return
  }
  func.func @transform_0(%arg0: i32) -> (i32, i32) {
    %c0_i32 = arith.constant 0 : i32
    %c0_i32_0 = arith.constant 0 : i32
    return %arg0, %c0_i32 : i32, i32
  }
  func.func @transform_1(%arg0: i32) -> (i32, i32) {
    %c0_i32 = arith.constant 0 : i32
    %c0_i32_0 = arith.constant 0 : i32
    return %arg0, %c0_i32 : i32, i32
  }
  func.func @transform_2(%arg0: i32) -> (i32, i32) {
    %c0_i32 = arith.constant 0 : i32
    %c0_i32_0 = arith.constant 0 : i32
    %c0_i32_1 = arith.constant 0 : i32
    return %c0_i32, %c0_i32_0 : i32, i32
  }
  func.func @transform_3(%arg0: i32) -> (i32, i32) {
    %c0_i32 = arith.constant 0 : i32
    %c0_i32_0 = arith.constant 0 : i32
    %c0_i32_1 = arith.constant 0 : i32
    return %c0_i32, %c0_i32_0 : i32, i32
  }
  func.func @transform_4(%arg0: i32) -> (i32, i32) {
    %c0_i32 = arith.constant 0 : i32
    %c0_i32_0 = arith.constant 0 : i32
    return %arg0, %c0_i32 : i32, i32
  }
}

</mosaic_0001>

<llo_original>
// kernel: tpu_custom_call.1
$region0: #{tpu_custom_call.1}
  #allocation0 [shape = 'u32[]', space=smem, size = 0x4, offset = 0x4, fixed_abs, tag = 'smem constant byte address 0x4 - core index']
  #allocation1 [shape = 'u32[144,128]{1,0:T(1,128)}', space=vmem, size = 0x12000, scoped, tag = 'internal scratch']
  %s0 = inlined_call_operand.hbm [shape: f32[16,128], index: 0, kind: input, shape index: {}]
  %s1 = inlined_call_operand.hbm [shape: f32[16,128], index: 1, kind: input, shape index: {}]
  %s2 = inlined_call_operand.vmem [shape: f32[1,128], index: 2, kind: input, shape index: {}]
  %s3 = inlined_call_operand.vmem [shape: f32[1,128], index: 3, kind: input, shape index: {}]
  %s4 = inlined_call_operand.hbm [shape: f32[8,128], index: 4, kind: output, shape index: {}]
  %s5 = sld [smem:[#allocation0]]
  $region34: #{tpu_custom_call.1} parent=0
    _
  %s7 = ssub.s32 1, %s5
  %s8 = scalar_select 0, %s7, %s5
  $region1: #{tpu_custom_call.1} parent=0
    #allocation2 [shape = 'u8[8192]{0}', space=vmem, size = 0x2000, scoped, tag = 'input window, operand 0, single buffered']
    #allocation3 [shape = 's32[1]{0}', space=sflag, size = 0x4, scoped, tag = 'scoped memory for tpu_custom_call.1']
    #allocation4 [shape = 's32[1]{0}', space=sflag, size = 0x4, scoped, tag = 'scoped memory for tpu_custom_call.1']
    #allocation5 [shape = 'u8[8192]{0}', space=vmem, size = 0x2000, scoped, tag = 'input window, operand 1, single buffered']
    #allocation6 [shape = 's32[1]{0}', space=sflag, size = 0x4, scoped, tag = 'scoped memory for tpu_custom_call.1']
    #allocation7 [shape = 'u8[4096]{0}', space=vmem, size = 0x1000, scoped, tag = 'output window, operand 0, single buffered']
    %9 = vsyncpa [#allocation3], 0
    %10 = vsyncpa [#allocation6], 0
    %11 = vsyncpa [#allocation4], 0
    // Predicated region
    $region2: #{tpu_custom_call.1} parent=1 // pred_check
      _
    $region3: #{tpu_custom_call.1} parent=1 // pred_check_branch
      %13 = sbr.rel (0) target = $region5
    $region4: #{tpu_custom_call.1} parent=1 // pred_region
      %s15 = ssub.s32 256, 256
      %16 = vsyncadd [#allocation3], %s15
      %s17 = sshll.u32 [#allocation2], 4
      %s18 = int_to_ptr.vmem [resolvable:$true] %s17
      %23 = dma.hbm_to_vmem [thread:$0]  %s0, 256, %s18, [#allocation3], 128, 128, 8
    $region5: #{tpu_custom_call.1} parent=1 // pred_fallthru
      _
    // Predicated region
    $region6: #{tpu_custom_call.1} parent=1 // pred_check
      _
    $region7: #{tpu_custom_call.1} parent=1 // pred_check_branch
      %25 = sbr.rel (0) target = $region9
    $region8: #{tpu_custom_call.1} parent=1 // pred_region
      %s27 = ssub.s32 256, 256
      %28 = vsyncadd [#allocation6], %s27
      %s29 = sshll.u32 [#allocation5], 4
      %s30 = int_to_ptr.vmem [resolvable:$true] %s29
      %35 = dma.hbm_to_vmem [thread:$0]  %s1, 256, %s30, [#allocation6], 128, 128, 8
    $region9: #{tpu_custom_call.1} parent=1 // pred_fallthru
      _
    // Predicated region
    $region10: #{tpu_custom_call.1} parent=1 // pred_check
      _
    $region11: #{tpu_custom_call.1} parent=1 // pred_check_branch
      %37 = sbr.rel (0) target = $region13
    $region12: #{tpu_custom_call.1} parent=1 // pred_region
      _
    $region13: #{tpu_custom_call.1} parent=1 // pred_fallthru
      _
    // Predicated region
    $region14: #{tpu_custom_call.1} parent=1 // pred_check
      _
    $region15: #{tpu_custom_call.1} parent=1 // pred_check_branch
      %39 = sbr.rel (0) target = $region17
    $region16: #{tpu_custom_call.1} parent=1 // pred_region
      _
    $region17: #{tpu_custom_call.1} parent=1 // pred_fallthru
      _
    // Predicated region
    $region18: #{tpu_custom_call.1} parent=1 // pred_check
      _
    $region19: #{tpu_custom_call.1} parent=1 // pred_check_branch
      %41 = sbr.rel (0) target = $region21
    $region20: #{tpu_custom_call.1} parent=1 // pred_region
      %42 = dma.done [#allocation3], 256
    $region21: #{tpu_custom_call.1} parent=1 // pred_fallthru
      _
    // Predicated region
    $region22: #{tpu_custom_call.1} parent=1 // pred_check
      _
    $region23: #{tpu_custom_call.1} parent=1 // pred_check_branch
      %44 = sbr.rel (0) target = $region25
    $region24: #{tpu_custom_call.1} parent=1 // pred_region
      %45 = dma.done [#allocation6], 256
    $region25: #{tpu_custom_call.1} parent=1 // pred_fallthru
      _
    %v46 = vld [vmem:[#allocation2] sm:$0xff]
    %v47 = vld [vmem:[#allocation2 + $0x8] sm:$0xff]
    %v48 = vld [vmem:[#allocation5] sm:$0xff]
    %v49 = vld [vmem:[#allocation5 + $0x8] sm:$0xff]
    %v50 = vld [vmem:[%s2] sm:$0x1]
    %v51 = vld [vmem:[%s3] sm:$0x1]
    %v53 = vlaneseq
    %v54 = vshrl.u32 %v53, 7
    %v55 = vsub.s32 0, %v54
    %v56 = vrot.slane %v50, %v55
    %v58 = vadd.f32 %v56, %v46
    %v59 = vadd.f32 %v56, %v47
    %v60 = vadd.f32 %v58, 1e-08
    %v61 = vadd.f32 %v59, 1e-08
    %v62 = vlog2.pop %v60
    %v63 = vmul.f32 %v62, 0.6931472
    %v64 = vlog2.pop %v61
    %v65 = vmul.f32 %v64, 0.6931472
    %v66 = vmul.f32 %v56, %v63
    %v67 = vmul.f32 %v56, %v65
    %v69 = vlaneseq
    %v70 = vshrl.u32 %v69, 7
    %v71 = vsub.s32 0, %v70
    %v72 = vrot.slane %v51, %v71
    %v74 = vsub.f32 %v72, %v66
    %v75 = vsub.f32 %v72, %v67
    %v76 = vadd.f32 %v46, 1e-08
    %v77 = vadd.f32 %v47, 1e-08
    %v78 = vlog2.pop %v76
    %v79 = vmul.f32 %v78, 0.6931472
    %v80 = vlog2.pop %v77
    %v81 = vmul.f32 %v80, 0.6931472
    %v82 = vsub.f32 %v79, %v63
    %v83 = vsub.f32 %v81, %v65
    %v84 = vmul.f32 %v48, %v82
    %v85 = vmul.f32 %v49, %v83
    %v86 = vadd.f32 %v74, %v84
    %v87 = vadd.f32 %v75, %v85
    %v88 = vadd.f32 %v48, %v56
    %v89 = vadd.f32 %v49, %v56
    %v90 = vsub.f32 %v88, 1.0
    %v91 = vsub.f32 %v89, 1.0
    %v92 = vmul.f32 %v90, 12.089551
    %v93 = vmul.f32 %v91, 12.089551
    %v94 = vadd.f32 %v92, 355.1434
    %v95 = vadd.f32 %v93, 355.1434
    %v96 = vmul.f32 %v94, %v90
    %v97 = vmul.f32 %v95, %v91
    %v98 = vadd.f32 %v96, 2521.6472
    %v99 = vadd.f32 %v97, 2521.6472
    %v100 = vmul.f32 %v98, %v90
    %v101 = vmul.f32 %v99, %v91
    %v102 = vadd.f32 %v100, 6237.7153
    %v103 = vadd.f32 %v101, 6237.7153
    %v104 = vadd.f32 %v90, 10.0
    %v105 = vadd.f32 %v91, 10.0
    %v106 = vmul.f32 %v104, %v90
    %v107 = vmul.f32 %v105, %v91
    %v108 = vadd.f32 %v106, 35.0
    %v109 = vadd.f32 %v107, 35.0
    %v110 = vmul.f32 %v108, %v90
    %v111 = vmul.f32 %v109, %v91
    %v112 = vadd.f32 %v110, 50.0
    %v113 = vadd.f32 %v111, 50.0
    %v114 = vmul.f32 %v112, %v90
    %v115 = vmul.f32 %v113, %v91
    %v116 = vadd.f32 %v114, 24.0
    %v117 = vadd.f32 %v115, 24.0
    %v118 = vrcp.pop %v116
    %v119 = vmul.f32 %v102, %v118
    %v120 = vrcp.pop %v117
    %v121 = vmul.f32 %v103, %v120
    %v122 = vadd.f32 %v119, 1.0
    %v123 = vadd.f32 %v121, 1.0
    %v124 = vmul.f32 %v90, 12.368782
    %v125 = vmul.f32 %v91, 12.368782
    %v126 = vadd.f32 %v124, 259.88297
    %v127 = vadd.f32 %v125, 259.88297
    %v128 = vmul.f32 %v126, %v90
    %v129 = vmul.f32 %v127, %v91
    %v130 = vadd.f32 %v128, 1807.9205
    %v131 = vadd.f32 %v129, 1807.9205
    %v132 = vmul.f32 %v130, %v90
    %v133 = vmul.f32 %v131, %v91
    %v134 = vadd.f32 %v132, 4163.67
    %v135 = vadd.f32 %v133, 4163.67
    %v136 = vadd.f32 %v90, 26.0
    %v137 = vadd.f32 %v91, 26.0
    %v138 = vmul.f32 %v136, %v90
    %v139 = vmul.f32 %v137, %v91
    %v140 = vadd.f32 %v138, 251.0
    %v141 = vadd.f32 %v139, 251.0
    %v142 = vmul.f32 %v140, %v90
    %v143 = vmul.f32 %v141, %v91
    %v144 = vadd.f32 %v142, 1066.0
    %v145 = vadd.f32 %v143, 1066.0
    %v146 = vmul.f32 %v144, %v90
    %v147 = vmul.f32 %v145, %v91
    %v148 = vadd.f32 %v146, 1680.0
    %v149 = vadd.f32 %v147, 1680.0
    %v150 = vrcp.pop %v148
    %v151 = vmul.f32 %v134, %v150
    %v152 = vrcp.pop %v149
    %v153 = vmul.f32 %v135, %v152
    %v154 = vadd.f32 %v122, %v151
    %v155 = vadd.f32 %v123, %v153
    %v156 = vadd.f32 %v90, 7.0
    %v157 = vadd.f32 %v91, 7.0
    %v158 = vadd.f32 %v156, 0.5
    %v159 = vadd.f32 %v157, 0.5
    %v160 = vadd.f32 %v90, 0.5
    %v161 = vadd.f32 %v91, 0.5
    %v162 = vlog2.pop %v158
    %v163 = vmul.f32 %v162, 0.6931472
    %v164 = vlog2.pop %v159
    %v165 = vmul.f32 %v164, 0.6931472
    %v166 = vmul.f32 %v160, %v163
    %v167 = vmul.f32 %v161, %v165
    %v168 = vadd.f32 %v166, 0.9189385
    %v169 = vadd.f32 %v167, 0.9189385
    %v170 = vsub.f32 %v168, %v158
    %v171 = vsub.f32 %v169, %v159
    %v172 = vlog2.pop %v154
    %v173 = vmul.f32 %v172, 0.6931472
    %v174 = vlog2.pop %v155
    %v175 = vmul.f32 %v174, 0.6931472
    %v176 = vadd.f32 %v170, %v173
    %v177 = vadd.f32 %v171, %v175
    %v178 = vadd.f32 %v86, %v176
    %v179 = vadd.f32 %v87, %v177
    %v180 = vadd.f32 %v48, 1.0
    %v181 = vadd.f32 %v49, 1.0
    %v182 = vsub.f32 %v180, 1.0
    %v183 = vsub.f32 %v181, 1.0
    %v184 = vmul.f32 %v182, 12.089551
    %v185 = vmul.f32 %v183, 12.089551
    %v186 = vadd.f32 %v184, 355.1434
    %v187 = vadd.f32 %v185, 355.1434
    %v188 = vmul.f32 %v186, %v182
    %v189 = vmul.f32 %v187, %v183
    %v190 = vadd.f32 %v188, 2521.6472
    %v191 = vadd.f32 %v189, 2521.6472
    %v192 = vmul.f32 %v190, %v182
    %v193 = vmul.f32 %v191, %v183
    %v194 = vadd.f32 %v192, 6237.7153
    %v195 = vadd.f32 %v193, 6237.7153
    %v196 = vadd.f32 %v182, 10.0
    %v197 = vadd.f32 %v183, 10.0
    %v198 = vmul.f32 %v196, %v182
    %v199 = vmul.f32 %v197, %v183
    %v200 = vadd.f32 %v198, 35.0
    %v201 = vadd.f32 %v199, 35.0
    %v202 = vmul.f32 %v200, %v182
    %v203 = vmul.f32 %v201, %v183
    %v204 = vadd.f32 %v202, 50.0
    %v205 = vadd.f32 %v203, 50.0
    %v206 = vmul.f32 %v204, %v182
    %v207 = vmul.f32 %v205, %v183
    %v208 = vadd.f32 %v206, 24.0
    %v209 = vadd.f32 %v207, 24.0
    %v210 = vrcp.pop %v208
    %v211 = vmul.f32 %v194, %v210
    %v212 = vrcp.pop %v209
    %v213 = vmul.f32 %v195, %v212
    %v214 = vadd.f32 %v211, 1.0
    %v215 = vadd.f32 %v213, 1.0
    %v216 = vmul.f32 %v182, 12.368782
    %v217 = vmul.f32 %v183, 12.368782
    %v218 = vadd.f32 %v216, 259.88297
    %v219 = vadd.f32 %v217, 259.88297
    %v220 = vmul.f32 %v218, %v182
    %v221 = vmul.f32 %v219, %v183
    %v222 = vadd.f32 %v220, 1807.9205
    %v223 = vadd.f32 %v221, 1807.9205
    %v224 = vmul.f32 %v222, %v182
    %v225 = vmul.f32 %v223, %v183
    %v226 = vadd.f32 %v224, 4163.67
    %v227 = vadd.f32 %v225, 4163.67
    %v228 = vadd.f32 %v182, 26.0
    %v229 = vadd.f32 %v183, 26.0
    %v230 = vmul.f32 %v228, %v182
    %v231 = vmul.f32 %v229, %v183
    %v232 = vadd.f32 %v230, 251.0
    %v233 = vadd.f32 %v231, 251.0
    %v234 = vmul.f32 %v232, %v182
    %v235 = vmul.f32 %v233, %v183
    %v236 = vadd.f32 %v234, 1066.0
    %v237 = vadd.f32 %v235, 1066.0
    %v238 = vmul.f32 %v236, %v182
    %v239 = vmul.f32 %v237, %v183
    %v240 = vadd.f32 %v238, 1680.0
    %v241 = vadd.f32 %v239, 1680.0
    %v242 = vrcp.pop %v240
    %v243 = vmul.f32 %v226, %v242
    %v244 = vrcp.pop %v241
    %v245 = vmul.f32 %v227, %v244
    %v246 = vadd.f32 %v214, %v243
    %v247 = vadd.f32 %v215, %v245
    %v248 = vadd.f32 %v182, 7.0
    %v249 = vadd.f32 %v183, 7.0
    %v250 = vadd.f32 %v248, 0.5
    %v251 = vadd.f32 %v249, 0.5
    %v252 = vadd.f32 %v182, 0.5
    %v253 = vadd.f32 %v183, 0.5
    %v254 = vlog2.pop %v250
    %v255 = vmul.f32 %v254, 0.6931472
    %v256 = vlog2.pop %v251
    %v257 = vmul.f32 %v256, 0.6931472
    %v258 = vmul.f32 %v252, %v255
    %v259 = vmul.f32 %v253, %v257
    %v260 = vadd.f32 %v258, 0.9189385
    %v261 = vadd.f32 %v259, 0.9189385
    %v262 = vsub.f32 %v260, %v250
    %v263 = vsub.f32 %v261, %v251
    %v264 = vlog2.pop %v246
    %v265 = vmul.f32 %v264, 0.6931472
    %v266 = vlog2.pop %v247
    %v267 = vmul.f32 %v266, 0.6931472
    %v268 = vadd.f32 %v262, %v265
    %v269 = vadd.f32 %v263, %v267
    %v270 = vsub.f32 %v178, %v268
    %v271 = vsub.f32 %v179, %v269
    %vm272 = vcmp.ne.f32.partialorder %v270, %v270
    %vm273 = vcmp.ne.f32.partialorder %v271, %v271
    %v274 = vsel %vm272, inf, %v270
    %v275 = vsel %vm273, inf, %v271
    %v276 = vadd.f32 %v274, %v275
    %277 = vst [vmem:[#allocation7] sm:$0xff] %v276
    // Predicated region
    $region26: #{tpu_custom_call.1} parent=1 // pred_check
      _
    $region27: #{tpu_custom_call.1} parent=1 // pred_check_branch
      %279 = sbr.rel (0) target = $region29
    $region28: #{tpu_custom_call.1} parent=1 // pred_region
      %s281 = ssub.s32 128, 128
      %282 = vsyncadd [#allocation4], %s281
      %s284 = sshll.u32 [#allocation7], 4
      %s285 = int_to_ptr.vmem [resolvable:$true] %s284
      %287 = dma.vmem_to_hbm [thread:$0]  %s285, 128, %s4, [#allocation4]
    $region29: #{tpu_custom_call.1} parent=1 // pred_fallthru
      _
    // Predicated region
    $region30: #{tpu_custom_call.1} parent=1 // pred_check
      _
    $region31: #{tpu_custom_call.1} parent=1 // pred_check_branch
      %289 = sbr.rel (0) target = $region33
    $region32: #{tpu_custom_call.1} parent=1 // pred_region
      %290 = dma.done [#allocation4], 128
    $region33: #{tpu_custom_call.1} parent=1 // pred_fallthru
      _
    %291 = vsyncpa [#allocation3], 1
    %292 = vsyncpa [#allocation6], 1
    %293 = vsyncpa [#allocation4], 1

</llo_original>
